<compile_context>
chip_gen: v5e
topology: v5e:2x2
jax: 0.10.0
libtpu: 0.0.40
codegen_flags: <defaults>
</compile_context>

<pallas_src>
import functools

import jax
import jax.numpy as jnp
from jax.experimental import pallas as pl
from jax.experimental.pallas import tpu as pltpu

_SQRT_2_OVER_PI = 0.7978845608028654


def _round_up(x, m):
    return ((x + m - 1) // m) * m


@functools.lru_cache(maxsize=None)
def _vmem_capacity_bytes():
    """Per-TensorCore VMEM capacity; conservative 64 MiB fallback (v7x-class)."""
    try:
        return int(pltpu.get_tpu_info().vmem_capacity_bytes)
    except Exception:
        return 64 << 20


def _footprint_bytes(tile_m, tile_h, e_pad, x_itemsize, w_itemsize):
    """Honest VMEM footprint of one grid step (double-buffered operands)."""
    return (
        2 * tile_m * e_pad * x_itemsize            # x tile, double-buffered
        + 2 * tile_m * e_pad * x_itemsize          # out tile, double-buffered
        + tile_m * e_pad * 4                       # f32 accumulator scratch
        + 2 * e_pad * tile_h * w_itemsize          # W1 block, double-buffered
        + 2 * tile_h * e_pad * w_itemsize          # W2 block, double-buffered
        + 2 * tile_h * w_itemsize                  # b1 block
        + 2 * e_pad * w_itemsize                   # b2 block
        + tile_m * tile_h * (2 * 4 + w_itemsize)   # GELU f32 temps + cast copy of g
    )


def _tile_h_candidates(h_pad):
    """All multiples of 128 that divide h_pad, largest first (ragged-H tolerant)."""
    q = h_pad // 128
    return [128 * d for d in range(q, 0, -1) if q % d == 0]


def _choose_tiles(m, e_pad, h_pad, x_itemsize, w_itemsize, budget):
    m_cap = _round_up(max(m, 1), 128)
    tms = [t for t in (1024, 768, 512, 384, 256, 128) if t <= m_cap] or [128]
    ths = _tile_h_candidates(h_pad)

    def fits(tm, th):
        return _footprint_bytes(tm, th, e_pad, x_itemsize, w_itemsize) <= budget

    # 1) Full weight residency (weights DMA'd from HBM exactly once) with the
    #    largest row tile that still fits — the primary win on v5e/v6e (128 MiB).
    for tm in tms:
        if tm < 256 and m_cap >= 256:
            break  # don't trade MXU fill for residency; fall through to (2)
        if fits(tm, h_pad):
            return tm, h_pad
    # 2) Weights too big to keep resident (typical on v7x, 64 MiB/TC): maximise
    #    the row tile first (arithmetic intensity ~ 2*tile_m/w_itemsize FLOPs
    #    per weight byte), then the largest hidden tile that fits.
    for tm in tms:
        for th in ths:
            if fits(tm, th):
                return tm, th
    return tms[-1], ths[-1]


def _ffn_kernel(x_ref, w1_ref, b1_ref, w2_ref, b2_ref, o_ref, acc_ref):
    """One (tile_m, tile_h) step of Linear -> GELU(tanh) -> Linear, accumulated over H."""
    j = pl.program_id(1)

    @pl.when(j == 0)
    def _():
        acc_ref[...] = jnp.zeros_like(acc_ref)

    # First linear (partial over hidden dim): (tm, E) @ (E, th) + (1, th).
    h = jnp.dot(x_ref[...], w1_ref[...], preferred_element_type=jnp.float32)
    h = h + b1_ref[...]

    # GELU, tanh approximation (matches the PyTorch module's GELU):
    #   0.5 * h * (1 + tanh(sqrt(2/pi) * (h + 0.044715 * h^3)))
    inner = h * (1.0 + 0.044715 * (h * h))
    g = 0.5 * h * (1.0 + jnp.tanh(_SQRT_2_OVER_PI * inner))

    # Feed the MXU in the weight dtype (bf16 models stay bf16); accumulate in f32.
    g = g.astype(w2_ref.dtype)
    acc_ref[...] += jnp.dot(g, w2_ref[...], preferred_element_type=jnp.float32)

    @pl.when(j == pl.num_programs(1) - 1)
    def _():
        o_ref[...] = (acc_ref[...] + b2_ref[...]).astype(o_ref.dtype)


@functools.partial(jax.jit, static_argnames=("tile_m", "tile_h"))
def feed_forward(x, w1, b1, w2, b2, *, tile_m=None, tile_h=None):
    """x: [B, T, E]; w1: [E, 4E]; b1: [4E]; w2: [4E, E]; b2: [E]."""
    B, T, E = x.shape
    H = w1.shape[1]
    M = B * T

    # Lane-dense padding: E (output / x lane dim) and H to multiples of 128.
    E_pad = _round_up(E, 128)
    H_pad = _round_up(H, 128)

    x_itemsize = x.dtype.itemsize
    w_itemsize = w1.dtype.itemsize

    cap = _vmem_capacity_bytes()
    budget = min(int(cap * 0.78), cap - (12 << 20))   # ~100 MiB v5e/v6e, ~50 MiB v7x

    tm_auto, th_auto = _choose_tiles(M, E_pad, H_pad, x_itemsize, w_itemsize, budget)
    if tile_m is None:
        tile_m = tm_auto
    tile_m = max(128, _round_up(int(tile_m), 128))
    if tile_h is None:
        tile_h = th_auto
    assert H_pad % tile_h == 0, "tile_h must divide the (padded) hidden dim"
    assert tile_h == H_pad or tile_h % 128 == 0, "tile_h must be lane-aligned"

    M_pad = _round_up(M, tile_m)

    # Zero-pad operands (padded rows/cols contribute exact zeros; GELU(0)=0).
    x2d = x.reshape(M, E)
    if (M_pad, E_pad) != (M, E):
        x2d = jnp.pad(x2d, ((0, M_pad - M), (0, E_pad - E)))
    w1p = jnp.pad(w1, ((0, E_pad - E), (0, H_pad - H))) if (E_pad, H_pad) != (E, H) else w1
    w2p = jnp.pad(w2, ((0, H_pad - H), (0, E_pad - E))) if (H_pad, E_pad) != (H, E) else w2
    b1p = jnp.pad(b1, (0, H_pad - H)) if H_pad != H else b1
    b2p = jnp.pad(b2, (0, E_pad - E)) if E_pad != E else b2
    b1_2d = b1p.reshape(1, H_pad)
    b2_2d = b2p.reshape(1, E_pad)

    grid = (M_pad // tile_m, H_pad // tile_h)
    n_row_tiles = grid[0]

    footprint = _footprint_bytes(tile_m, tile_h, E_pad, x_itemsize, w_itemsize)
    vmem_limit = max(32 << 20, min(int(footprint * 1.25) + (4 << 20), cap - (8 << 20)))

    # Honest HBM traffic: weights are re-streamed once per row tile unless they
    # are fully resident (tile_h == H_pad, constant index_map across i).
    weight_bytes = 2 * E_pad * H_pad * w_itemsize
    weight_reads = 1 if tile_h == H_pad else n_row_tiles
    cost = pl.CostEstimate(
        flops=4 * M_pad * E_pad * H_pad,            # two matmuls: 2*M*E*H each
        transcendentals=M_pad * H_pad,              # one tanh per hidden element
        bytes_accessed=(2 * M_pad * E_pad * x_itemsize    # x in + out
                        + weight_bytes * weight_reads     # W1 + W2 (re-stream aware)
                        + (E_pad + H_pad) * w_itemsize),  # biases
    )

    out2d = pl.pallas_call(
        _ffn_kernel,
        out_shape=jax.ShapeDtypeStruct((M_pad, E_pad), x.dtype),
        grid_spec=pltpu.PrefetchScalarGridSpec(
            num_scalar_prefetch=0,
            grid=grid,
            in_specs=[
                pl.BlockSpec((tile_m, E_pad), lambda i, j: (i, 0)),   # x row tile
                pl.BlockSpec((E_pad, tile_h), lambda i, j: (0, j)),   # W1 column block
                pl.BlockSpec((1, tile_h), lambda i, j: (0, j)),       # b1 block
                pl.BlockSpec((tile_h, E_pad), lambda i, j: (j, 0)),   # W2 row block
                pl.BlockSpec((1, E_pad), lambda i, j: (0, 0)),        # b2 (constant)
            ],
            out_specs=pl.BlockSpec((tile_m, E_pad), lambda i, j: (i, 0)),
            scratch_shapes=[pltpu.VMEM((tile_m, E_pad), jnp.float32)],
        ),
        compiler_params=pltpu.CompilerParams(
            dimension_semantics=("parallel", "arbitrary"),
            vmem_limit_bytes=vmem_limit,
        ),
        cost_estimate=cost,
    )(x2d, w1p, b1_2d, w2p, b2_2d)

    out2d = out2d[:M, :E]
    return out2d.reshape(B, T, E)


def _reference(x, w1, b1, w2, b2):
    h = x @ w1 + b1
    g = 0.5 * h * (1.0 + jnp.tanh(_SQRT_2_OVER_PI * (h + 0.044715 * h ** 3)))
    return g @ w2 + b2


if __name__ == "__main__":
    # Small config consistent with the module: emb_dim=32 -> hidden=4*32=128.
    cfg = {"emb_dim": 32}
    B, T, E = 2, 8, cfg["emb_dim"]
    H = 4 * E

    key = jax.random.PRNGKey(0)
    kx, kw1, kb1, kw2, kb2, kx2 = jax.random.split(key, 6)

    # Deterministic parameter init mimicking nn.Linear (uniform +-1/sqrt(fan_in)).
    bound1 = 1.0 / (E ** 0.5)
    bound2 = 1.0 / (H ** 0.5)
    w1 = jax.random.uniform(kw1, (E, H), jnp.float32, -bound1, bound1)
    b1 = jax.random.uniform(kb1, (H,), jnp.float32, -bound1, bound1)
    w2 = jax.random.uniform(kw2, (H, E), jnp.float32, -bound2, bound2)
    b2 = jax.random.uniform(kb2, (E,), jnp.float32, -bound2, bound2)

    x = jax.random.normal(kx, (B, T, E), jnp.float32)

    out = feed_forward(x, w1, b1, w2, b2)
    out = jax.block_until_ready(out)
    ref = _reference(x, w1, b1, w2, b2)
    assert out.shape == (B, T, E)
    assert jnp.allclose(out, ref, atol=1e-5, rtol=1e-5), "mismatch vs reference"

    # Also exercise the padded-M path (B*T not a multiple of the row tile).
    x_odd = jax.random.normal(kx2, (1, 5, E), jnp.float32)
    out_odd = jax.block_until_ready(feed_forward(x_odd, w1, b1, w2, b2))
    ref_odd = _reference(x_odd, w1, b1, w2, b2)
    assert jnp.allclose(out_odd, ref_odd, atol=1e-5, rtol=1e-5), "mismatch (padded path)"

    print("KERNEL_OK")
</pallas_src>

<mosaic_0001>
module attributes {stable_mosaic.version = 11 : i64} {
  func.func @_ffn_kernel(%arg0: i32, %arg1: i32, %arg2: memref<128x128xf32, #tpu.memory_space<vmem>>, %arg3: memref<128x128xf32, #tpu.memory_space<vmem>>, %arg4: memref<1x128xf32, #tpu.memory_space<vmem>>, %arg5: memref<128x128xf32, #tpu.memory_space<vmem>>, %arg6: memref<1x128xf32, #tpu.memory_space<vmem>>, %arg7: memref<128x128xf32, #tpu.memory_space<vmem>>, %arg8: memref<128x128xf32, #tpu.memory_space<vmem>>) attributes {dimension_semantics = [#tpu.dimension_semantics<parallel>, #tpu.dimension_semantics<arbitrary>], iteration_bounds = array<i64: 1, 1>, scalar_prefetch = 0 : i64, scratch_operands = 1 : i64, tpu.core_type = #tpu.core_type<tc>, window_params = [{transform_indices = @transform_0, window_bounds = array<i64: 128, 128>}, {transform_indices = @transform_1, window_bounds = array<i64: 128, 128>}, {transform_indices = @transform_2, window_bounds = array<i64: 1, 128>}, {transform_indices = @transform_3, window_bounds = array<i64: 128, 128>}, {pipeline_mode = #tpu.pipeline_mode<synchronous>, transform_indices = @transform_4, window_bounds = array<i64: 1, 128>}, {transform_indices = @transform_5, window_bounds = array<i64: 128, 128>}]} {
    %c0_i32 = arith.constant 0 : i32
    %0 = arith.cmpi eq, %arg1, %c0_i32 : i32
    %1 = arith.extui %0 : i1 to i32
    %c0_i32_0 = arith.constant 0 : i32
    %2 = arith.cmpi ne, %1, %c0_i32_0 : i32
    scf.if %2 {
      %cst_20 = arith.constant 0.000000e+00 : f32
      %31 = vector.broadcast %cst_20 : f32 to vector<128x128xf32>
      %c0_21 = arith.constant 0 : index
      %c0_22 = arith.constant 0 : index
      %32 = vector.load %arg8[%c0_21, %c0_22] : memref<128x128xf32, #tpu.memory_space<vmem>>, vector<128x128xf32>
      tpu.vector_store %arg8[%c0_21, %c0_22], %31 {strides = array<i32>} : memref<128x128xf32, #tpu.memory_space<vmem>>, vector<128x128xf32>,
    } else {
    }
    %c0 = arith.constant 0 : index
    %c0_1 = arith.constant 0 : index
    %3 = vector.load %arg2[%c0, %c0_1] : memref<128x128xf32, #tpu.memory_space<vmem>>, vector<128x128xf32>
    %c0_2 = arith.constant 0 : index
    %c0_3 = arith.constant 0 : index
    %4 = vector.load %arg3[%c0_2, %c0_3] : memref<128x128xf32, #tpu.memory_space<vmem>>, vector<128x128xf32>
    %cst = arith.constant dense<0.000000e+00> : vector<128x128xf32>
    %5 = tpu.matmul %3, %4, %cst {dimension_numbers = #tpu.dot_dimension_numbers<[1], [0], [0], [1], [0, 0, 1, 1], [], []>} : vector<128x128xf32>, vector<128x128xf32>, vector<128x128xf32> -> vector<128x128xf32>
    %c0_4 = arith.constant 0 : index
    %c0_5 = arith.constant 0 : index
    %6 = vector.load %arg4[%c0_4, %c0_5] : memref<1x128xf32, #tpu.memory_space<vmem>>, vector<1x128xf32>
    %7 = vector.broadcast %6 : vector<1x128xf32> to vector<128x128xf32>
    %8 = arith.addf %5, %7 : vector<128x128xf32>
    %9 = arith.mulf %8, %8 : vector<128x128xf32>
    %cst_6 = arith.constant 4.471500e-02 : f32
    %10 = vector.broadcast %cst_6 : f32 to vector<128x128xf32>
    %11 = arith.mulf %10, %9 : vector<128x128xf32>
    %cst_7 = arith.constant 1.000000e+00 : f32
    %12 = vector.broadcast %cst_7 : f32 to vector<128x128xf32>
    %13 = arith.addf %12, %11 : vector<128x128xf32>
    %14 = arith.mulf %8, %13 : vector<128x128xf32>
    %cst_8 = arith.constant 5.000000e-01 : f32
    %15 = vector.broadcast %cst_8 : f32 to vector<128x128xf32>
    %16 = arith.mulf %15, %8 : vector<128x128xf32>
    %cst_9 = arith.constant 0.797884583 : f32
    %17 = vector.broadcast %cst_9 : f32 to vector<128x128xf32>
    %18 = arith.mulf %17, %14 : vector<128x128xf32>
    %19 = math.tanh %18 : vector<128x128xf32>
    %cst_10 = arith.constant 1.000000e+00 : f32
    %20 = vector.broadcast %cst_10 : f32 to vector<128x128xf32>
    %21 = arith.addf %20, %19 : vector<128x128xf32>
    %22 = arith.mulf %16, %21 : vector<128x128xf32>
    %c0_11 = arith.constant 0 : index
    %c0_12 = arith.constant 0 : index
    %23 = vector.load %arg8[%c0_11, %c0_12] : memref<128x128xf32, #tpu.memory_space<vmem>>, vector<128x128xf32>
    %c0_13 = arith.constant 0 : index
    %c0_14 = arith.constant 0 : index
    %24 = vector.load %arg5[%c0_13, %c0_14] : memref<128x128xf32, #tpu.memory_space<vmem>>, vector<128x128xf32>
    %cst_15 = arith.constant dense<0.000000e+00> : vector<128x128xf32>
    %25 = tpu.matmul %22, %24, %cst_15 {dimension_numbers = #tpu.dot_dimension_numbers<[1], [0], [0], [1], [0, 0, 1, 1], [], []>} : vector<128x128xf32>, vector<128x128xf32>, vector<128x128xf32> -> vector<128x128xf32>
    %26 = arith.addf %23, %25 : vector<128x128xf32>
    %c0_16 = arith.constant 0 : index
    %c0_17 = arith.constant 0 : index
    %27 = vector.load %arg8[%c0_16, %c0_17] : memref<128x128xf32, #tpu.memory_space<vmem>>, vector<128x128xf32>
    tpu.vector_store %arg8[%c0_16, %c0_17], %26 {strides = array<i32>} : memref<128x128xf32, #tpu.memory_space<vmem>>, vector<128x128xf32>,
    %c0_i32_18 = arith.constant 0 : i32
    %28 = arith.cmpi eq, %arg1, %c0_i32_18 : i32
    %29 = arith.extui %28 : i1 to i32
    %c0_i32_19 = arith.constant 0 : i32
    %30 = arith.cmpi ne, %29, %c0_i32_19 : i32
    scf.if %30 {
      %c0_20 = arith.constant 0 : index
      %c0_21 = arith.constant 0 : index
      %31 = vector.load %arg8[%c0_20, %c0_21] : memref<128x128xf32, #tpu.memory_space<vmem>>, vector<128x128xf32>
      %c0_22 = arith.constant 0 : index
      %c0_23 = arith.constant 0 : index
      %32 = vector.load %arg6[%c0_22, %c0_23] : memref<1x128xf32, #tpu.memory_space<vmem>>, vector<1x128xf32>
      %33 = vector.broadcast %32 : vector<1x128xf32> to vector<128x128xf32>
      %34 = arith.addf %31, %33 : vector<128x128xf32>
      %c0_24 = arith.constant 0 : index
      %c0_25 = arith.constant 0 : index
      %35 = vector.load %arg7[%c0_24, %c0_25] : memref<128x128xf32, #tpu.memory_space<vmem>>, vector<128x128xf32>
      tpu.vector_store %arg7[%c0_24, %c0_25], %34 {strides = array<i32>} : memref<128x128xf32, #tpu.memory_space<vmem>>, vector<128x128xf32>,
    } else {
    }
    return
  }
  func.func @transform_0(%arg0: i32, %arg1: i32) -> (i32, i32) {
    %c0_i32 = arith.constant 0 : i32
    %c0_i32_0 = arith.constant 0 : i32
    return %arg0, %c0_i32 : i32, i32
  }
  func.func @transform_1(%arg0: i32, %arg1: i32) -> (i32, i32) {
    %c0_i32 = arith.constant 0 : i32
    %c0_i32_0 = arith.constant 0 : i32
    return %c0_i32, %arg1 : i32, i32
  }
  func.func @transform_2(%arg0: i32, %arg1: i32) -> (i32, i32) {
    %c0_i32 = arith.constant 0 : i32
    %c0_i32_0 = arith.constant 0 : i32
    return %c0_i32, %arg1 : i32, i32
  }
  func.func @transform_3(%arg0: i32, %arg1: i32) -> (i32, i32) {
    %c0_i32 = arith.constant 0 : i32
    %c0_i32_0 = arith.constant 0 : i32
    return %arg1, %c0_i32 : i32, i32
  }
  func.func @transform_4(%arg0: i32, %arg1: i32) -> (i32, i32) {
    %c0_i32 = arith.constant 0 : i32
    %c0_i32_0 = arith.constant 0 : i32
    %c0_i32_1 = arith.constant 0 : i32
    return %c0_i32, %c0_i32_0 : i32, i32
  }
  func.func @transform_5(%arg0: i32, %arg1: i32) -> (i32, i32) {
    %c0_i32 = arith.constant 0 : i32
    %c0_i32_0 = arith.constant 0 : i32
    return %arg0, %c0_i32 : i32, i32
  }
}

</mosaic_0001>

<llo_original>
// kernel: feed_forward.1
$region0: #{feed_forward.1}
  #allocation0 [shape = 'u32[]', space=smem, size = 0x4, offset = 0x4, fixed_abs, tag = 'smem constant byte address 0x4 - core index']
  #allocation1 [shape = 'u32[72,128]{1,0:T(1,128)}', space=vmem, size = 0x9000, scoped, tag = 'internal scratch']
  #allocation2 [shape = 'f32[128,128]{1,0:T(8,128)}', space=vmem, size = 0x10000, scoped, tag = 'scratch operand']
  %s0 = inlined_call_operand.vmem [shape: f32[128,128], index: 0, kind: input, shape index: {}]
  %s1 = inlined_call_operand.vmem [shape: f32[128,128], index: 1, kind: input, shape index: {}]
  %s2 = inlined_call_operand.vmem [shape: f32[1,128], index: 2, kind: input, shape index: {}]
  %s3 = inlined_call_operand.vmem [shape: f32[128,128], index: 3, kind: input, shape index: {}]
  %s4 = inlined_call_operand.vmem [shape: f32[1,128], index: 4, kind: input, shape index: {}]
  %s5 = inlined_call_operand.vmem [shape: f32[128,128], index: 5, kind: output, shape index: {}]
  %s6 = sld [smem:[#allocation0]]
  $region38: #{feed_forward.1} parent=0
    _
  %s8 = ssub.s32 1, %s6
  %s9 = scalar_select 0, %s8, %s6
  // Predicated region
  $region2: #{feed_forward.1} parent=0 // pred_check
    _
  $region3: #{feed_forward.1} parent=0 // pred_check_branch
    %11 = sbr.rel (0) target = $region5
  $region4: #{feed_forward.1} parent=0 // pred_region
    _
  $region5: #{feed_forward.1} parent=0 // pred_fallthru
    _
  // Predicated region
  $region6: #{feed_forward.1} parent=0 // pred_check
    _
  $region7: #{feed_forward.1} parent=0 // pred_check_branch
    %13 = sbr.rel (0) target = $region9
  $region8: #{feed_forward.1} parent=0 // pred_region
    _
  $region9: #{feed_forward.1} parent=0 // pred_fallthru
    _
  // Predicated region
  $region10: #{feed_forward.1} parent=0 // pred_check
    _
  $region11: #{feed_forward.1} parent=0 // pred_check_branch
    %15 = sbr.rel (0) target = $region13
  $region12: #{feed_forward.1} parent=0 // pred_region
    _
  $region13: #{feed_forward.1} parent=0 // pred_fallthru
    _
  // Predicated region
  $region14: #{feed_forward.1} parent=0 // pred_check
    _
  $region15: #{feed_forward.1} parent=0 // pred_check_branch
    %17 = sbr.rel (0) target = $region17
  $region16: #{feed_forward.1} parent=0 // pred_region
    _
  $region17: #{feed_forward.1} parent=0 // pred_fallthru
    _
  // Predicated region
  $region18: #{feed_forward.1} parent=0 // pred_check
    _
  $region19: #{feed_forward.1} parent=0 // pred_check_branch
    %19 = sbr.rel (0) target = $region21
  $region20: #{feed_forward.1} parent=0 // pred_region
    _
  $region21: #{feed_forward.1} parent=0 // pred_fallthru
    _
  %p20 = scmp.eq.s32.totalorder 0, 0
  // Predicated region
  $region22: #{feed_forward.1} parent=0 // pred_check
    %p21 = pneg %p20
  $region23: #{feed_forward.1} parent=0 // pred_check_branch
    %23 = sbr.rel (%p21) target = $region25
  $region24: #{feed_forward.1} parent=0 // pred_region
    %24 = vst [vmem:[#allocation2] sm:$0xff] 0.0
    %25 = vst [vmem:[#allocation2 + $0x8] sm:$0xff] 0.0
    %26 = vst [vmem:[#allocation2 + $0x10] sm:$0xff] 0.0
    %27 = vst [vmem:[#allocation2 + $0x18] sm:$0xff] 0.0
    %28 = vst [vmem:[#allocation2 + $0x20] sm:$0xff] 0.0
    %29 = vst [vmem:[#allocation2 + $0x28] sm:$0xff] 0.0
    %30 = vst [vmem:[#allocation2 + $0x30] sm:$0xff] 0.0
    %31 = vst [vmem:[#allocation2 + $0x38] sm:$0xff] 0.0
    %32 = vst [vmem:[#allocation2 + $0x40] sm:$0xff] 0.0
    %33 = vst [vmem:[#allocation2 + $0x48] sm:$0xff] 0.0
    %34 = vst [vmem:[#allocation2 + $0x50] sm:$0xff] 0.0
    %35 = vst [vmem:[#allocation2 + $0x58] sm:$0xff] 0.0
    %36 = vst [vmem:[#allocation2 + $0x60] sm:$0xff] 0.0
    %37 = vst [vmem:[#allocation2 + $0x68] sm:$0xff] 0.0
    %38 = vst [vmem:[#allocation2 + $0x70] sm:$0xff] 0.0
    %39 = vst [vmem:[#allocation2 + $0x78] sm:$0xff] 0.0
  $region25: #{feed_forward.1} parent=0 // pred_fallthru
    _
  %v40 = vld [vmem:[%s0] sm:$0xff]
  %v41 = vld [vmem:[%s0 + $0x8] sm:$0xff]
  %v42 = vld [vmem:[%s0 + $0x10] sm:$0xff]
  %v43 = vld [vmem:[%s0 + $0x18] sm:$0xff]
  %v44 = vld [vmem:[%s0 + $0x20] sm:$0xff]
  %v45 = vld [vmem:[%s0 + $0x28] sm:$0xff]
  %v46 = vld [vmem:[%s0 + $0x30] sm:$0xff]
  %v47 = vld [vmem:[%s0 + $0x38] sm:$0xff]
  %v48 = vld [vmem:[%s0 + $0x40] sm:$0xff]
  %v49 = vld [vmem:[%s0 + $0x48] sm:$0xff]
  %v50 = vld [vmem:[%s0 + $0x50] sm:$0xff]
  %v51 = vld [vmem:[%s0 + $0x58] sm:$0xff]
  %v52 = vld [vmem:[%s0 + $0x60] sm:$0xff]
  %v53 = vld [vmem:[%s0 + $0x68] sm:$0xff]
  %v54 = vld [vmem:[%s0 + $0x70] sm:$0xff]
  %v55 = vld [vmem:[%s0 + $0x78] sm:$0xff]
  %v56 = vld [vmem:[%s1] sm:$0xff]
  %v57 = vld [vmem:[%s1 + $0x8] sm:$0xff]
  %v58 = vld [vmem:[%s1 + $0x10] sm:$0xff]
  %v59 = vld [vmem:[%s1 + $0x18] sm:$0xff]
  %v60 = vld [vmem:[%s1 + $0x20] sm:$0xff]
  %v61 = vld [vmem:[%s1 + $0x28] sm:$0xff]
  %v62 = vld [vmem:[%s1 + $0x30] sm:$0xff]
  %v63 = vld [vmem:[%s1 + $0x38] sm:$0xff]
  %v64 = vld [vmem:[%s1 + $0x40] sm:$0xff]
  %v65 = vld [vmem:[%s1 + $0x48] sm:$0xff]
  %v66 = vld [vmem:[%s1 + $0x50] sm:$0xff]
  %v67 = vld [vmem:[%s1 + $0x58] sm:$0xff]
  %v68 = vld [vmem:[%s1 + $0x60] sm:$0xff]
  %v69 = vld [vmem:[%s1 + $0x68] sm:$0xff]
  %v70 = vld [vmem:[%s1 + $0x70] sm:$0xff]
  %v71 = vld [vmem:[%s1 + $0x78] sm:$0xff]
  %v72 = vld [vmem:[%s2] sm:$0x1]
  %v74 = vperm.slane %v72, 0
  %76 = vmatpush.msra.mxu0 %v71
  %77 = vmatpush.msra.mxu0 %v70
  %78 = vmatpush.msra.mxu0 %v69
  %79 = vmatpush.msra.mxu0 %v68
  %80 = vmatpush.msra.mxu0 %v67
  %81 = vmatpush.msra.mxu0 %v66
  %82 = vmatpush.msra.mxu0 %v65
  %83 = vmatpush.msra.mxu0 %v64
  %84 = vmatpush.msra.mxu0 %v63
  %85 = vmatpush.msra.mxu0 %v62
  %86 = vmatpush.msra.mxu0 %v61
  %87 = vmatpush.msra.mxu0 %v60
  %88 = vmatpush.msra.mxu0 %v59
  %89 = vmatpush.msra.mxu0 %v58
  %90 = vmatpush.msra.mxu0 %v57
  %91 = vmatpush.msra.mxu0 %v56
  %92 = vmatmul.f32.gmra.mxu0 %v40
  %v93 = vpop.f32.mrf.mxu0
  %v94 = vadd.f32 %v74, %v93
  %95 = vmatmul.f32.gmra.mxu0 %v41
  %v96 = vpop.f32.mrf.mxu0
  %v97 = vadd.f32 %v74, %v96
  %98 = vmatmul.f32.gmra.mxu0 %v42
  %v99 = vpop.f32.mrf.mxu0
  %v100 = vadd.f32 %v74, %v99
  %101 = vmatmul.f32.gmra.mxu0 %v43
  %v102 = vpop.f32.mrf.mxu0
  %v103 = vadd.f32 %v74, %v102
  %104 = vmatmul.f32.gmra.mxu0 %v44
  %v105 = vpop.f32.mrf.mxu0
  %v106 = vadd.f32 %v74, %v105
  %107 = vmatmul.f32.gmra.mxu0 %v45
  %v108 = vpop.f32.mrf.mxu0
  %v109 = vadd.f32 %v74, %v108
  %110 = vmatmul.f32.gmra.mxu0 %v46
  %v111 = vpop.f32.mrf.mxu0
  %v112 = vadd.f32 %v74, %v111
  %113 = vmatmul.f32.gmra.mxu0 %v47
  %v114 = vpop.f32.mrf.mxu0
  %v115 = vadd.f32 %v74, %v114
  %116 = vmatmul.f32.gmra.mxu0 %v48
  %v117 = vpop.f32.mrf.mxu0
  %v118 = vadd.f32 %v74, %v117
  %119 = vmatmul.f32.gmra.mxu0 %v49
  %v120 = vpop.f32.mrf.mxu0
  %v121 = vadd.f32 %v74, %v120
  %122 = vmatmul.f32.gmra.mxu0 %v50
  %v123 = vpop.f32.mrf.mxu0
  %v124 = vadd.f32 %v74, %v123
  %125 = vmatmul.f32.gmra.mxu0 %v51
  %v126 = vpop.f32.mrf.mxu0
  %v127 = vadd.f32 %v74, %v126
  %128 = vmatmul.f32.gmra.mxu0 %v52
  %v129 = vpop.f32.mrf.mxu0
  %v130 = vadd.f32 %v74, %v129
  %131 = vmatmul.f32.gmra.mxu0 %v53
  %v132 = vpop.f32.mrf.mxu0
  %v133 = vadd.f32 %v74, %v132
  %134 = vmatmul.f32.gmra.mxu0 %v54
  %v135 = vpop.f32.mrf.mxu0
  %v136 = vadd.f32 %v74, %v135
  %137 = vmatmul.f32.gmra.mxu0 %v55
  %v138 = vpop.f32.mrf.mxu0
  %v139 = vadd.f32 %v74, %v138
  %140 = vdwg.mxu0
  %v141 = vmul.f32 %v94, %v94
  %v142 = vmul.f32 %v97, %v97
  %v143 = vmul.f32 %v100, %v100
  %v144 = vmul.f32 %v103, %v103
  %v145 = vmul.f32 %v106, %v106
  %v146 = vmul.f32 %v109, %v109
  %v147 = vmul.f32 %v112, %v112
  %v148 = vmul.f32 %v115, %v115
  %v149 = vmul.f32 %v118, %v118
  %v150 = vmul.f32 %v121, %v121
  %v151 = vmul.f32 %v124, %v124
  %v152 = vmul.f32 %v127, %v127
  %v153 = vmul.f32 %v130, %v130
  %v154 = vmul.f32 %v133, %v133
  %v155 = vmul.f32 %v136, %v136
  %v156 = vmul.f32 %v139, %v139
  %v157 = vmul.f32 %v141, 0.044715
  %v158 = vmul.f32 %v142, 0.044715
  %v159 = vmul.f32 %v143, 0.044715
  %v160 = vmul.f32 %v144, 0.044715
  %v161 = vmul.f32 %v145, 0.044715
  %v162 = vmul.f32 %v146, 0.044715
  %v163 = vmul.f32 %v147, 0.044715
  %v164 = vmul.f32 %v148, 0.044715
  %v165 = vmul.f32 %v149, 0.044715
  %v166 = vmul.f32 %v150, 0.044715
  %v167 = vmul.f32 %v151, 0.044715
  %v168 = vmul.f32 %v152, 0.044715
  %v169 = vmul.f32 %v153, 0.044715
  %v170 = vmul.f32 %v154, 0.044715
  %v171 = vmul.f32 %v155, 0.044715
  %v172 = vmul.f32 %v156, 0.044715
  %v173 = vadd.f32 %v157, 1.0
  %v174 = vadd.f32 %v158, 1.0
  %v175 = vadd.f32 %v159, 1.0
  %v176 = vadd.f32 %v160, 1.0
  %v177 = vadd.f32 %v161, 1.0
  %v178 = vadd.f32 %v162, 1.0
  %v179 = vadd.f32 %v163, 1.0
  %v180 = vadd.f32 %v164, 1.0
  %v181 = vadd.f32 %v165, 1.0
  %v182 = vadd.f32 %v166, 1.0
  %v183 = vadd.f32 %v167, 1.0
  %v184 = vadd.f32 %v168, 1.0
  %v185 = vadd.f32 %v169, 1.0
  %v186 = vadd.f32 %v170, 1.0
  %v187 = vadd.f32 %v171, 1.0
  %v188 = vadd.f32 %v172, 1.0
  %v189 = vmul.f32 %v94, %v173
  %v190 = vmul.f32 %v97, %v174
  %v191 = vmul.f32 %v100, %v175
  %v192 = vmul.f32 %v103, %v176
  %v193 = vmul.f32 %v106, %v177
  %v194 = vmul.f32 %v109, %v178
  %v195 = vmul.f32 %v112, %v179
  %v196 = vmul.f32 %v115, %v180
  %v197 = vmul.f32 %v118, %v181
  %v198 = vmul.f32 %v121, %v182
  %v199 = vmul.f32 %v124, %v183
  %v200 = vmul.f32 %v127, %v184
  %v201 = vmul.f32 %v130, %v185
  %v202 = vmul.f32 %v133, %v186
  %v203 = vmul.f32 %v136, %v187
  %v204 = vmul.f32 %v139, %v188
  %v205 = vmul.f32 %v94, 0.5
  %v206 = vmul.f32 %v97, 0.5
  %v207 = vmul.f32 %v100, 0.5
  %v208 = vmul.f32 %v103, 0.5
  %v209 = vmul.f32 %v106, 0.5
  %v210 = vmul.f32 %v109, 0.5
  %v211 = vmul.f32 %v112, 0.5
  %v212 = vmul.f32 %v115, 0.5
  %v213 = vmul.f32 %v118, 0.5
  %v214 = vmul.f32 %v121, 0.5
  %v215 = vmul.f32 %v124, 0.5
  %v216 = vmul.f32 %v127, 0.5
  %v217 = vmul.f32 %v130, 0.5
  %v218 = vmul.f32 %v133, 0.5
  %v219 = vmul.f32 %v136, 0.5
  %v220 = vmul.f32 %v139, 0.5
  %v221 = vmul.f32 %v189, 0.7978846
  %v222 = vmul.f32 %v190, 0.7978846
  %v223 = vmul.f32 %v191, 0.7978846
  %v224 = vmul.f32 %v192, 0.7978846
  %v225 = vmul.f32 %v193, 0.7978846
  %v226 = vmul.f32 %v194, 0.7978846
  %v227 = vmul.f32 %v195, 0.7978846
  %v228 = vmul.f32 %v196, 0.7978846
  %v229 = vmul.f32 %v197, 0.7978846
  %v230 = vmul.f32 %v198, 0.7978846
  %v231 = vmul.f32 %v199, 0.7978846
  %v232 = vmul.f32 %v200, 0.7978846
  %v233 = vmul.f32 %v201, 0.7978846
  %v234 = vmul.f32 %v202, 0.7978846
  %v235 = vmul.f32 %v203, 0.7978846
  %v236 = vmul.f32 %v204, 0.7978846
  %v237 = vtanh.pop %v221
  %v238 = vtanh.pop %v222
  %v239 = vtanh.pop %v223
  %v240 = vtanh.pop %v224
  %v241 = vtanh.pop %v225
  %v242 = vtanh.pop %v226
  %v243 = vtanh.pop %v227
  %v244 = vtanh.pop %v228
  %v245 = vtanh.pop %v229
  %v246 = vtanh.pop %v230
  %v247 = vtanh.pop %v231
  %v248 = vtanh.pop %v232
  %v249 = vtanh.pop %v233
  %v250 = vtanh.pop %v234
  %v251 = vtanh.pop %v235
  %v252 = vtanh.pop %v236
  %v253 = vadd.f32 %v237, 1.0
  %v254 = vadd.f32 %v238, 1.0
  %v255 = vadd.f32 %v239, 1.0
  %v256 = vadd.f32 %v240, 1.0
  %v257 = vadd.f32 %v241, 1.0
  %v258 = vadd.f32 %v242, 1.0
  %v259 = vadd.f32 %v243, 1.0
  %v260 = vadd.f32 %v244, 1.0
  %v261 = vadd.f32 %v245, 1.0
  %v262 = vadd.f32 %v246, 1.0
  %v263 = vadd.f32 %v247, 1.0
  %v264 = vadd.f32 %v248, 1.0
  %v265 = vadd.f32 %v249, 1.0
  %v266 = vadd.f32 %v250, 1.0
  %v267 = vadd.f32 %v251, 1.0
  %v268 = vadd.f32 %v252, 1.0
  %v269 = vmul.f32 %v205, %v253
  %v270 = vmul.f32 %v206, %v254
  %v271 = vmul.f32 %v207, %v255
  %v272 = vmul.f32 %v208, %v256
  %v273 = vmul.f32 %v209, %v257
  %v274 = vmul.f32 %v210, %v258
  %v275 = vmul.f32 %v211, %v259
  %v276 = vmul.f32 %v212, %v260
  %v277 = vmul.f32 %v213, %v261
  %v278 = vmul.f32 %v214, %v262
  %v279 = vmul.f32 %v215, %v263
  %v280 = vmul.f32 %v216, %v264
  %v281 = vmul.f32 %v217, %v265
  %v282 = vmul.f32 %v218, %v266
  %v283 = vmul.f32 %v219, %v267
  %v284 = vmul.f32 %v220, %v268
  %v285 = vld [vmem:[#allocation2] sm:$0xff]
  %v286 = vld [vmem:[#allocation2 + $0x8] sm:$0xff]
  %v287 = vld [vmem:[#allocation2 + $0x10] sm:$0xff]
  %v288 = vld [vmem:[#allocation2 + $0x18] sm:$0xff]
  %v289 = vld [vmem:[#allocation2 + $0x20] sm:$0xff]
  %v290 = vld [vmem:[#allocation2 + $0x28] sm:$0xff]
  %v291 = vld [vmem:[#allocation2 + $0x30] sm:$0xff]
  %v292 = vld [vmem:[#allocation2 + $0x38] sm:$0xff]
  %v293 = vld [vmem:[#allocation2 + $0x40] sm:$0xff]
  %v294 = vld [vmem:[#allocation2 + $0x48] sm:$0xff]
  %v295 = vld [vmem:[#allocation2 + $0x50] sm:$0xff]
  %v296 = vld [vmem:[#allocation2 + $0x58] sm:$0xff]
  %v297 = vld [vmem:[#allocation2 + $0x60] sm:$0xff]
  %v298 = vld [vmem:[#allocation2 + $0x68] sm:$0xff]
  %v299 = vld [vmem:[#allocation2 + $0x70] sm:$0xff]
  %v300 = vld [vmem:[#allocation2 + $0x78] sm:$0xff]
  %v301 = vld [vmem:[%s3] sm:$0xff]
  %v302 = vld [vmem:[%s3 + $0x8] sm:$0xff]
  %v303 = vld [vmem:[%s3 + $0x10] sm:$0xff]
  %v304 = vld [vmem:[%s3 + $0x18] sm:$0xff]
  %v305 = vld [vmem:[%s3 + $0x20] sm:$0xff]
  %v306 = vld [vmem:[%s3 + $0x28] sm:$0xff]
  %v307 = vld [vmem:[%s3 + $0x30] sm:$0xff]
  %v308 = vld [vmem:[%s3 + $0x38] sm:$0xff]
  %v309 = vld [vmem:[%s3 + $0x40] sm:$0xff]
  %v310 = vld [vmem:[%s3 + $0x48] sm:$0xff]
  %v311 = vld [vmem:[%s3 + $0x50] sm:$0xff]
  %v312 = vld [vmem:[%s3 + $0x58] sm:$0xff]
  %v313 = vld [vmem:[%s3 + $0x60] sm:$0xff]
  %v314 = vld [vmem:[%s3 + $0x68] sm:$0xff]
  %v315 = vld [vmem:[%s3 + $0x70] sm:$0xff]
  %v316 = vld [vmem:[%s3 + $0x78] sm:$0xff]
  %317 = vmatpush.msra.mxu0 %v316
  %318 = vmatpush.msra.mxu0 %v315
  %319 = vmatpush.msra.mxu0 %v314
  %320 = vmatpush.msra.mxu0 %v313
  %321 = vmatpush.msra.mxu0 %v312
  %322 = vmatpush.msra.mxu0 %v311
  %323 = vmatpush.msra.mxu0 %v310
  %324 = vmatpush.msra.mxu0 %v309
  %325 = vmatpush.msra.mxu0 %v308
  %326 = vmatpush.msra.mxu0 %v307
  %327 = vmatpush.msra.mxu0 %v306
  %328 = vmatpush.msra.mxu0 %v305
  %329 = vmatpush.msra.mxu0 %v304
  %330 = vmatpush.msra.mxu0 %v303
  %331 = vmatpush.msra.mxu0 %v302
  %332 = vmatpush.msra.mxu0 %v301
  %333 = vmatmul.f32.gmra.mxu0 %v269
  %v334 = vpop.f32.mrf.mxu0
  %v335 = vadd.f32 0.0, %v334
  %336 = vmatmul.f32.gmra.mxu0 %v270
  %v337 = vpop.f32.mrf.mxu0
  %v338 = vadd.f32 0.0, %v337
  %339 = vmatmul.f32.gmra.mxu0 %v271
  %v340 = vpop.f32.mrf.mxu0
  %v341 = vadd.f32 0.0, %v340
  %342 = vmatmul.f32.gmra.mxu0 %v272
  %v343 = vpop.f32.mrf.mxu0
  %v344 = vadd.f32 0.0, %v343
  %345 = vmatmul.f32.gmra.mxu0 %v273
  %v346 = vpop.f32.mrf.mxu0
  %v347 = vadd.f32 0.0, %v346
  %348 = vmatmul.f32.gmra.mxu0 %v274
  %v349 = vpop.f32.mrf.mxu0
  %v350 = vadd.f32 0.0, %v349
  %351 = vmatmul.f32.gmra.mxu0 %v275
  %v352 = vpop.f32.mrf.mxu0
  %v353 = vadd.f32 0.0, %v352
  %354 = vmatmul.f32.gmra.mxu0 %v276
  %v355 = vpop.f32.mrf.mxu0
  %v356 = vadd.f32 0.0, %v355
  %357 = vmatmul.f32.gmra.mxu0 %v277
  %v358 = vpop.f32.mrf.mxu0
  %v359 = vadd.f32 0.0, %v358
  %360 = vmatmul.f32.gmra.mxu0 %v278
  %v361 = vpop.f32.mrf.mxu0
  %v362 = vadd.f32 0.0, %v361
  %363 = vmatmul.f32.gmra.mxu0 %v279
  %v364 = vpop.f32.mrf.mxu0
  %v365 = vadd.f32 0.0, %v364
  %366 = vmatmul.f32.gmra.mxu0 %v280
  %v367 = vpop.f32.mrf.mxu0
  %v368 = vadd.f32 0.0, %v367
  %369 = vmatmul.f32.gmra.mxu0 %v281
  %v370 = vpop.f32.mrf.mxu0
  %v371 = vadd.f32 0.0, %v370
  %372 = vmatmul.f32.gmra.mxu0 %v282
  %v373 = vpop.f32.mrf.mxu0
  %v374 = vadd.f32 0.0, %v373
  %375 = vmatmul.f32.gmra.mxu0 %v283
  %v376 = vpop.f32.mrf.mxu0
  %v377 = vadd.f32 0.0, %v376
  %378 = vmatmul.f32.gmra.mxu0 %v284
  %v379 = vpop.f32.mrf.mxu0
  %v380 = vadd.f32 0.0, %v379
  %381 = vdwg.mxu0
  %v382 = vadd.f32 %v285, %v335
  %v383 = vadd.f32 %v286, %v338
  %v384 = vadd.f32 %v287, %v341
  %v385 = vadd.f32 %v288, %v344
  %v386 = vadd.f32 %v289, %v347
  %v387 = vadd.f32 %v290, %v350
  %v388 = vadd.f32 %v291, %v353
  %v389 = vadd.f32 %v292, %v356
  %v390 = vadd.f32 %v293, %v359
  %v391 = vadd.f32 %v294, %v362
  %v392 = vadd.f32 %v295, %v365
  %v393 = vadd.f32 %v296, %v368
  %v394 = vadd.f32 %v297, %v371
  %v395 = vadd.f32 %v298, %v374
  %v396 = vadd.f32 %v299, %v377
  %v397 = vadd.f32 %v300, %v380
  %398 = vst [vmem:[#allocation2] sm:$0xff] %v382
  %399 = vst [vmem:[#allocation2 + $0x8] sm:$0xff] %v383
  %400 = vst [vmem:[#allocation2 + $0x10] sm:$0xff] %v384
  %401 = vst [vmem:[#allocation2 + $0x18] sm:$0xff] %v385
  %402 = vst [vmem:[#allocation2 + $0x20] sm:$0xff] %v386
  %403 = vst [vmem:[#allocation2 + $0x28] sm:$0xff] %v387
  %404 = vst [vmem:[#allocation2 + $0x30] sm:$0xff] %v388
  %405 = vst [vmem:[#allocation2 + $0x38] sm:$0xff] %v389
  %406 = vst [vmem:[#allocation2 + $0x40] sm:$0xff] %v390
  %407 = vst [vmem:[#allocation2 + $0x48] sm:$0xff] %v391
  %408 = vst [vmem:[#allocation2 + $0x50] sm:$0xff] %v392
  %409 = vst [vmem:[#allocation2 + $0x58] sm:$0xff] %v393
  %410 = vst [vmem:[#allocation2 + $0x60] sm:$0xff] %v394
  %411 = vst [vmem:[#allocation2 + $0x68] sm:$0xff] %v395
  %412 = vst [vmem:[#allocation2 + $0x70] sm:$0xff] %v396
  %413 = vst [vmem:[#allocation2 + $0x78] sm:$0xff] %v397
  // Predicated region
  $region26: #{feed_forward.1} parent=0 // pred_check
    %p414 = pneg %p20
  $region27: #{feed_forward.1} parent=0 // pred_check_branch
    %416 = sbr.rel (%p414) target = $region29
  $region28: #{feed_forward.1} parent=0 // pred_region
    %v417 = vld [vmem:[#allocation2] sm:$0xff]
    %v418 = vld [vmem:[#allocation2 + $0x8] sm:$0xff]
    %v419 = vld [vmem:[#allocation2 + $0x10] sm:$0xff]
    %v420 = vld [vmem:[#allocation2 + $0x18] sm:$0xff]
    %v421 = vld [vmem:[#allocation2 + $0x20] sm:$0xff]
    %v422 = vld [vmem:[#allocation2 + $0x28] sm:$0xff]
    %v423 = vld [vmem:[#allocation2 + $0x30] sm:$0xff]
    %v424 = vld [vmem:[#allocation2 + $0x38] sm:$0xff]
    %v425 = vld [vmem:[#allocation2 + $0x40] sm:$0xff]
    %v426 = vld [vmem:[#allocation2 + $0x48] sm:$0xff]
    %v427 = vld [vmem:[#allocation2 + $0x50] sm:$0xff]
    %v428 = vld [vmem:[#allocation2 + $0x58] sm:$0xff]
    %v429 = vld [vmem:[#allocation2 + $0x60] sm:$0xff]
    %v430 = vld [vmem:[#allocation2 + $0x68] sm:$0xff]
    %v431 = vld [vmem:[#allocation2 + $0x70] sm:$0xff]
    %v432 = vld [vmem:[#allocation2 + $0x78] sm:$0xff]
    %v433 = vld [vmem:[%s4] sm:$0x1]
    %v435 = vperm.slane %v433, 0
    %v437 = vadd.f32 %v417, %v435
    %v438 = vadd.f32 %v418, %v435
    %v439 = vadd.f32 %v419, %v435
    %v440 = vadd.f32 %v420, %v435
    %v441 = vadd.f32 %v421, %v435
    %v442 = vadd.f32 %v422, %v435
    %v443 = vadd.f32 %v423, %v435
    %v444 = vadd.f32 %v424, %v435
    %v445 = vadd.f32 %v425, %v435
    %v446 = vadd.f32 %v426, %v435
    %v447 = vadd.f32 %v427, %v435
    %v448 = vadd.f32 %v428, %v435
    %v449 = vadd.f32 %v429, %v435
    %v450 = vadd.f32 %v430, %v435
    %v451 = vadd.f32 %v431, %v435
    %v452 = vadd.f32 %v432, %v435
    %453 = vst [vmem:[%s5] sm:$0xff] %v437
    %454 = vst [vmem:[%s5 + $0x8] sm:$0xff] %v438
    %455 = vst [vmem:[%s5 + $0x10] sm:$0xff] %v439
    %456 = vst [vmem:[%s5 + $0x18] sm:$0xff] %v440
    %457 = vst [vmem:[%s5 + $0x20] sm:$0xff] %v441
    %458 = vst [vmem:[%s5 + $0x28] sm:$0xff] %v442
    %459 = vst [vmem:[%s5 + $0x30] sm:$0xff] %v443
    %460 = vst [vmem:[%s5 + $0x38] sm:$0xff] %v444
    %461 = vst [vmem:[%s5 + $0x40] sm:$0xff] %v445
    %462 = vst [vmem:[%s5 + $0x48] sm:$0xff] %v446
    %463 = vst [vmem:[%s5 + $0x50] sm:$0xff] %v447
    %464 = vst [vmem:[%s5 + $0x58] sm:$0xff] %v448
    %465 = vst [vmem:[%s5 + $0x60] sm:$0xff] %v449
    %466 = vst [vmem:[%s5 + $0x68] sm:$0xff] %v450
    %467 = vst [vmem:[%s5 + $0x70] sm:$0xff] %v451
    %468 = vst [vmem:[%s5 + $0x78] sm:$0xff] %v452
  $region29: #{feed_forward.1} parent=0 // pred_fallthru
    _
  // Predicated region
  $region30: #{feed_forward.1} parent=0 // pred_check
    _
  $region31: #{feed_forward.1} parent=0 // pred_check_branch
    %470 = sbr.rel (0) target = $region33
  $region32: #{feed_forward.1} parent=0 // pred_region
    _
  $region33: #{feed_forward.1} parent=0 // pred_fallthru
    _
  // Predicated region
  $region34: #{feed_forward.1} parent=0 // pred_check
    _
  $region35: #{feed_forward.1} parent=0 // pred_check_branch
    %472 = sbr.rel (0) target = $region37
  $region36: #{feed_forward.1} parent=0 // pred_region
    _
  $region37: #{feed_forward.1} parent=0 // pred_fallthru
    _

</llo_original>
